<compile_context>
chip_gen: v7x
topology: tpu7x:2x2x1
jax: 0.10.0
libtpu: 0.0.40
codegen_flags: <defaults>
</compile_context>

<pallas_src>
import math

import jax
import jax.numpy as jnp
from jax.experimental import pallas as pl
from jax.experimental.pallas import tpu as pltpu


def _round_up(x, m):
    return ((x + m - 1) // m) * m


def _sublane_multiple(dtype):
    # Sub-32-bit dtypes pack along sublanes; keep batch tiles pack-aligned.
    itemsize = jnp.dtype(dtype).itemsize
    return {4: 8, 2: 16, 1: 32}.get(itemsize, 8)


def _make_memory_unit_kernel(array_resident, tn):
    def kernel(emb_ref, index_t_ref, array_ref, out_ref):
        # emb_ref:     [TB, E]      input dtype
        # index_t_ref: [E,  K]      input dtype (pre-transposed in the wrapper)
        # array_ref:   [K, IO_pad]  (resident)  or  [K, TN]  (streamed)
        # out_ref:     [TB, TN]
        #
        # Attention recomputed every step (E~32, K~10 -> negligible) so no
        # cross-step scratch exists and both grid axes can be "parallel".
        scores = jnp.dot(
            emb_ref[...], index_t_ref[...], preferred_element_type=jnp.float32
        )
        m = jnp.max(scores, axis=-1, keepdims=True)
        e = jnp.exp(scores - m)
        denom = jnp.sum(e, axis=-1, keepdims=True)
        # approx reciprocal -> EUP slot; rows sum to 1 within ~2^-12 rel. err.
        att = (e * pl.reciprocal(denom, approx=True)).astype(array_ref.dtype)

        if array_resident:
            j = pl.program_id(1)
            start = pl.multiple_of(j * tn, tn)
            arr_tile = array_ref[:, pl.ds(start, tn)]
        else:
            arr_tile = array_ref[...]

        out = jnp.dot(att, arr_tile, preferred_element_type=jnp.float32)
        out_ref[...] = out.astype(out_ref.dtype)

    return kernel


def memory_unit_forward(bias_emb, index, array, input_size, output_size, *,
                        tb=256, tn=2048, out_dtype=None, force_pallas=False,
                        array_resident_bytes=(4 << 20)):
    """bias_emb: [B, 1, E]  ->  [B, output_size, input_size]"""
    B = bias_emb.shape[0]
    E = bias_emb.shape[-1]
    K = index.shape[0]
    IO = array.shape[1]
    assert IO == input_size * output_size

    dtype = bias_emb.dtype
    out_dtype = dtype if out_dtype is None else jnp.dtype(out_dtype)
    itemsize = jnp.dtype(dtype).itemsize
    out_itemsize = jnp.dtype(out_dtype).itemsize

    sub = _sublane_multiple(dtype)
    b_pad_est = _round_up(max(B, sub), sub)
    io_pad_est = _round_up(IO, 128)

    # ---- small-problem fallback: plain XLA beats kernel launch overhead ----
    if not force_pallas and b_pad_est * io_pad_est * itemsize < (1 << 20):
        att = jax.nn.softmax(
            jnp.matmul(bias_emb, jnp.swapaxes(index, -1, -2)[None]), axis=-1)
        para = jnp.matmul(att, array[None]).astype(out_dtype)
        return para.reshape(-1, output_size, input_size)

    # ---- wrapper-side layout plumbing (no compute) --------------------------
    emb2d = bias_emb.reshape(B, E)

    TB = min(tb, _round_up(max(B, sub), sub))
    B_pad = _round_up(max(B, TB), TB)
    TN = min(tn, _round_up(IO, 128))
    IO_pad = _round_up(IO, TN)

    if B_pad != B:
        emb2d = jnp.pad(emb2d, ((0, B_pad - B), (0, 0)))
    arr = array
    if IO_pad != IO:
        arr = jnp.pad(arr, ((0, 0), (0, IO_pad - IO)))

    # Pre-transpose `index` once here so the kernel never pays an XLU transpose.
    index_t = index.T  # [E, K]

    nb = B_pad // TB
    nj = IO_pad // TN

    # Keep the whole memory array resident in VMEM when it is small (typical
    # K ~ 10 clusters): it is DMA'd from HBM exactly once instead of once per
    # B tile, and frees a double-buffered DMA stream every grid step.
    array_bytes = K * IO_pad * itemsize
    array_resident = array_bytes <= array_resident_bytes

    if array_resident:
        array_spec = pl.BlockSpec((K, IO_pad), lambda i, j: (0, 0))
    else:
        array_spec = pl.BlockSpec((K, TN), lambda i, j: (0, j))

    cost = pl.CostEstimate(
        flops=2 * nb * nj * TB * E * K + 2 * B_pad * K * IO_pad,
        transcendentals=nb * nj * TB * K,
        bytes_accessed=(B_pad * E * itemsize
                        + E * K * itemsize
                        + (1 if array_resident else nb) * K * IO_pad * itemsize
                        + B_pad * IO_pad * out_itemsize),
    )

    out = pl.pallas_call(
        _make_memory_unit_kernel(array_resident, TN),
        out_shape=jax.ShapeDtypeStruct((B_pad, IO_pad), out_dtype),
        grid=(nb, nj),
        in_specs=[
            pl.BlockSpec((TB, E), lambda i, j: (i, 0)),   # emb: per B-tile
            pl.BlockSpec((E, K), lambda i, j: (0, 0)),    # index^T: resident
            array_spec,                                   # memory array
        ],
        out_specs=pl.BlockSpec((TB, TN), lambda i, j: (i, j)),
        compiler_params=pltpu.CompilerParams(
            # No cross-step scratch -> every grid point is independent, so both
            # axes are core-shardable (matters on v7x's 2 TensorCores).
            dimension_semantics=("parallel", "parallel"),
        ),
        cost_estimate=cost,
    )(emb2d, index_t, arr)

    # Drop padding, then para_new.view(-1, output_size, input_size).
    out = out[:B, :IO]
    return out.reshape(B, output_size, input_size)


def xavier_uniform(key, shape, dtype=jnp.float32):
    # PyTorch xavier_uniform_ on a 2-D tensor: fan_out = shape[0], fan_in = shape[1]
    fan_out, fan_in = shape
    bound = math.sqrt(6.0 / (fan_in + fan_out))
    return jax.random.uniform(key, shape, dtype=dtype, minval=-bound, maxval=bound)


def _reference(bias_emb, index, array, input_size, output_size):
    att = jax.nn.softmax(
        jnp.matmul(bias_emb, jnp.swapaxes(index, -1, -2)[None]), axis=-1)
    return jnp.matmul(att, array[None]).reshape(-1, output_size, input_size)


if __name__ == "__main__":
    key = jax.random.PRNGKey(0)

    # ---- config A: tiny module-default shapes (plain-XLA fallback path) ----
    batch, emb_size, input_size, output_size, clusters_k = 2, 32, 8, 4, 10
    k_arr, k_idx, k_emb = jax.random.split(key, 3)
    array = xavier_uniform(k_arr, (clusters_k, input_size * output_size))
    index = xavier_uniform(k_idx, (clusters_k, emb_size))
    bias_emb = jax.random.normal(k_emb, (batch, 1, emb_size), dtype=jnp.float32)

    ref_a = _reference(bias_emb, index, array, input_size, output_size)

    out_a = jax.block_until_ready(
        memory_unit_forward(bias_emb, index, array, input_size, output_size))
    assert out_a.shape == (batch, output_size, input_size)
    assert jnp.allclose(out_a, ref_a, atol=2e-3, rtol=2e-3), float(
        jnp.max(jnp.abs(out_a - ref_a)))

    # ---- config B: same tiny shapes forced through the Pallas kernel -------
    out_b = jax.block_until_ready(
        memory_unit_forward(bias_emb, index, array, input_size, output_size,
                            force_pallas=True))
    assert jnp.allclose(out_b, ref_a, atol=2e-3, rtol=2e-3), float(
        jnp.max(jnp.abs(out_b - ref_a)))

    # ---- config C: small multi-tile Pallas run (nb=2, nj=4), both kernel
    #      variants (array resident in VMEM vs. streamed tiles) --------------
    batch2, input2, output2 = 16, 32, 16   # IO = 512
    k_arr2, k_idx2, k_emb2 = jax.random.split(jax.random.PRNGKey(0), 3)
    array2 = xavier_uniform(k_arr2, (clusters_k, input2 * output2))
    index2 = xavier_uniform(k_idx2, (clusters_k, emb_size))
    bias_emb2 = jax.random.normal(k_emb2, (batch2, 1, emb_size), dtype=jnp.float32)

    ref_c = _reference(bias_emb2, index2, array2, input2, output2)

    out_c_res = jax.block_until_ready(
        memory_unit_forward(bias_emb2, index2, array2, input2, output2,
                            tb=8, tn=128, force_pallas=True))
    assert out_c_res.shape == (batch2, output2, input2)
    assert jnp.allclose(out_c_res, ref_c, atol=2e-3, rtol=2e-3), float(
        jnp.max(jnp.abs(out_c_res - ref_c)))

    out_c_str = jax.block_until_ready(
        memory_unit_forward(bias_emb2, index2, array2, input2, output2,
                            tb=8, tn=128, force_pallas=True,
                            array_resident_bytes=0))
    assert jnp.allclose(out_c_str, ref_c, atol=2e-3, rtol=2e-3), float(
        jnp.max(jnp.abs(out_c_str - ref_c)))

    print("KERNEL_OK")
</pallas_src>

<mosaic_0001>
module attributes {stable_mosaic.version = 11 : i64} {
  func.func @kernel(%arg0: i32, %arg1: i32, %arg2: memref<8x32xf32, #tpu.memory_space<vmem>>, %arg3: memref<32x10xf32, #tpu.memory_space<vmem>>, %arg4: memref<10x128xf32, #tpu.memory_space<vmem>>, %arg5: memref<8x128xf32, #tpu.memory_space<vmem>>) attributes {dimension_semantics = [#tpu.dimension_semantics<parallel>, #tpu.dimension_semantics<parallel>], iteration_bounds = array<i64: 1, 1>, scalar_prefetch = 0 : i64, scratch_operands = 0 : i64, tpu.core_type = #tpu.core_type<tc>, window_params = [{transform_indices = @transform_0, window_bounds = array<i64: 8, 32>}, {pipeline_mode = #tpu.pipeline_mode<synchronous>, transform_indices = @transform_1, window_bounds = array<i64: 32, 10>}, {pipeline_mode = #tpu.pipeline_mode<synchronous>, transform_indices = @transform_2, window_bounds = array<i64: 10, 128>}, {transform_indices = @transform_3, window_bounds = array<i64: 8, 128>}]} {
    %c0 = arith.constant 0 : index
    %c0_0 = arith.constant 0 : index
    %0 = vector.load %arg2[%c0, %c0_0] : memref<8x32xf32, #tpu.memory_space<vmem>>, vector<8x32xf32>
    %c0_1 = arith.constant 0 : index
    %c0_2 = arith.constant 0 : index
    %1 = vector.load %arg3[%c0_1, %c0_2] : memref<32x10xf32, #tpu.memory_space<vmem>>, vector<32x10xf32>
    %cst = arith.constant dense<0.000000e+00> : vector<8x10xf32>
    %2 = tpu.matmul %0, %1, %cst {dimension_numbers = #tpu.dot_dimension_numbers<[1], [0], [0], [1], [0, 0, 1, 1], [], []>} : vector<8x32xf32>, vector<32x10xf32>, vector<8x10xf32> -> vector<8x10xf32>
    %cst_3 = arith.constant dense<0xFF800000> : vector<8xf32>
    %3 = vector.multi_reduction <maximumf>, %2, %cst_3 [1] : vector<8x10xf32> to vector<8xf32>
    %4 = vector.shape_cast %3 : vector<8xf32> to vector<8x1xf32>
    %5 = vector.broadcast %4 : vector<8x1xf32> to vector<8x10xf32>
    %6 = arith.subf %2, %5 : vector<8x10xf32>
    %7 = math.exp %6 : vector<8x10xf32>
    %cst_4 = arith.constant dense<0.000000e+00> : vector<8xf32>
    %8 = vector.multi_reduction <add>, %7, %cst_4 [1] : vector<8x10xf32> to vector<8xf32>
    %9 = vector.shape_cast %8 : vector<8xf32> to vector<8x1xf32>
    %10 = tpu.reciprocal %9 {approx = true} : vector<8x1xf32> -> vector<8x1xf32>
    %11 = vector.broadcast %10 : vector<8x1xf32> to vector<8x10xf32>
    %12 = arith.mulf %7, %11 : vector<8x10xf32>
    %c128_i32 = arith.constant 128 : i32
    %13 = arith.muli %arg1, %c128_i32 : i32
    %14 = tpu.assume_multiple %13, 128 : i32
    %c0_5 = arith.constant 0 : index
    %15 = arith.index_cast %14 : i32 to index
    %16 = vector.load %arg4[%c0_5, %15] : memref<10x128xf32, #tpu.memory_space<vmem>>, vector<10x128xf32>
    %cst_6 = arith.constant dense<0.000000e+00> : vector<8x128xf32>
    %17 = tpu.matmul %12, %16, %cst_6 {dimension_numbers = #tpu.dot_dimension_numbers<[1], [0], [0], [1], [0, 0, 1, 1], [], []>} : vector<8x10xf32>, vector<10x128xf32>, vector<8x128xf32> -> vector<8x128xf32>
    %c0_7 = arith.constant 0 : index
    %c0_8 = arith.constant 0 : index
    %18 = vector.load %arg5[%c0_7, %c0_8] : memref<8x128xf32, #tpu.memory_space<vmem>>, vector<8x128xf32>
    tpu.vector_store %arg5[%c0_7, %c0_8], %17 {strides = array<i32>} : memref<8x128xf32, #tpu.memory_space<vmem>>, vector<8x128xf32>,
    return
  }
  func.func @transform_0(%arg0: i32, %arg1: i32) -> (i32, i32) {
    %c0_i32 = arith.constant 0 : i32
    %c0_i32_0 = arith.constant 0 : i32
    return %arg0, %c0_i32 : i32, i32
  }
  func.func @transform_1(%arg0: i32, %arg1: i32) -> (i32, i32) {
    %c0_i32 = arith.constant 0 : i32
    %c0_i32_0 = arith.constant 0 : i32
    %c0_i32_1 = arith.constant 0 : i32
    return %c0_i32, %c0_i32_0 : i32, i32
  }
  func.func @transform_2(%arg0: i32, %arg1: i32) -> (i32, i32) {
    %c0_i32 = arith.constant 0 : i32
    %c0_i32_0 = arith.constant 0 : i32
    %c0_i32_1 = arith.constant 0 : i32
    return %c0_i32, %c0_i32_0 : i32, i32
  }
  func.func @transform_3(%arg0: i32, %arg1: i32) -> (i32, i32) {
    %c0_i32 = arith.constant 0 : i32
    return %arg0, %arg1 : i32, i32
  }
}

</mosaic_0001>

<llo_original>
// kernel: tpu_custom_call.1
$region0: #{tpu_custom_call.1}
  #allocation0 [shape = 'u32[]', space=smem, size = 0x4, offset = 0x4, fixed_abs, tag = 'smem constant byte address 0x4 - core index']
  #allocation1 [shape = 'u32[144,128]{1,0:T(1,128)}', space=vmem, size = 0x12000, scoped, tag = 'internal scratch']
  %s0 = inlined_call_operand.vmem [shape: f32[8,32], index: 0, kind: input, shape index: {}]
  %s1 = inlined_call_operand.vmem [shape: f32[32,10], index: 1, kind: input, shape index: {}]
  %s2 = inlined_call_operand.vmem [shape: f32[10,128], index: 2, kind: input, shape index: {}]
  %s3 = inlined_call_operand.hbm [shape: f32[8,128], index: 3, kind: output, shape index: {}]
  %s4 = sld [smem:[#allocation0]]
  $region22: #{tpu_custom_call.1} parent=0
    _
  %s6 = ssub.s32 1, %s4
  %s7 = scalar_select 0, %s6, %s4
  $region1: #{tpu_custom_call.1} parent=0
    #allocation2 [shape = 'u8[4096]{0}', space=vmem, size = 0x1000, scoped, tag = 'output window, operand 0, single buffered']
    #allocation3 [shape = 's32[1]{0}', space=sflag, size = 0x4, scoped, tag = 'scoped memory for tpu_custom_call.1']
    %8 = vsyncpa [#allocation3], 0
    // Predicated region
    $region2: #{tpu_custom_call.1} parent=1 // pred_check
      _
    $region3: #{tpu_custom_call.1} parent=1 // pred_check_branch
      %10 = sbr.rel (0) target = $region5
    $region4: #{tpu_custom_call.1} parent=1 // pred_region
      _
    $region5: #{tpu_custom_call.1} parent=1 // pred_fallthru
      _
    // Predicated region
    $region6: #{tpu_custom_call.1} parent=1 // pred_check
      _
    $region7: #{tpu_custom_call.1} parent=1 // pred_check_branch
      %12 = sbr.rel (0) target = $region9
    $region8: #{tpu_custom_call.1} parent=1 // pred_region
      _
    $region9: #{tpu_custom_call.1} parent=1 // pred_fallthru
      _
    // Predicated region
    $region10: #{tpu_custom_call.1} parent=1 // pred_check
      _
    $region11: #{tpu_custom_call.1} parent=1 // pred_check_branch
      %14 = sbr.rel (0) target = $region13
    $region12: #{tpu_custom_call.1} parent=1 // pred_region
      _
    $region13: #{tpu_custom_call.1} parent=1 // pred_fallthru
      _
    %v15 = vld [vmem:[%s0] sm:$0xff]
    %v16 = vld [vmem:[%s1] sm:$0xff]
    %v17 = vld [vmem:[%s1 + $0x8] sm:$0xff]
    %v18 = vld [vmem:[%s1 + $0x10] sm:$0xff]
    %v19 = vld [vmem:[%s1 + $0x18] sm:$0xff]
    %vm20 = vcmask 261120
    %v22 = vsel %vm20, %v15, 0
    %24 = vmatprep.subr.mxu0 0.0
    %25 = vmatpush1.msra.mxu0 %v16
    %26 = vmatprep.subr.mxu0 0.0
    %27 = vmatpush1.msra.mxu0 %v17
    %28 = vmatprep.subr.mxu0 0.0
    %29 = vmatpush1.msra.mxu0 %v18
    %30 = vmatprep.subr.mxu0 0.0
    %31 = vmatpush1.msra.mxu0 %v19
    %32 = vmatprep.subr.mxu0 0.0
    %33 = vmatpush1.msra.mxu0 0.0
    %34 = vmatprep.subr.mxu0 0.0
    %35 = vmatpush1.msra.mxu0 0.0
    %36 = vmatprep.subr.mxu0 0.0
    %37 = vmatpush1.msra.mxu0 0.0
    %38 = vmatprep.subr.mxu0 0.0
    %39 = vmatpush1.msra.mxu0 0.0
    %40 = vmatprep.subr.mxu0 0.0
    %41 = vmatpush1.msra.mxu0 0.0
    %42 = vmatprep.subr.mxu0 0.0
    %43 = vmatpush1.msra.mxu0 0.0
    %44 = vmatprep.subr.mxu0 0.0
    %45 = vmatpush1.msra.mxu0 0.0
    %46 = vmatprep.subr.mxu0 0.0
    %47 = vmatpush1.msra.mxu0 0.0
    %48 = vmatprep.subr.mxu0 0.0
    %49 = vmatpush1.msra.mxu0 0.0
    %50 = vmatprep.subr.mxu0 0.0
    %51 = vmatpush1.msra.mxu0 0.0
    %52 = vmatprep.subr.mxu0 0.0
    %53 = vmatpush1.msra.mxu0 0.0
    %54 = vmatprep.subr.mxu0 0.0
    %55 = vmatpush1.msra.mxu0 0.0
    %56 = vmatprep.subr.mxu0 0.0
    %57 = vmatpush1.msra.mxu0 0.0
    %58 = vmatprep.subr.mxu0 0.0
    %59 = vmatpush1.msra.mxu0 0.0
    %60 = vmatprep.subr.mxu0 0.0
    %61 = vmatpush1.msra.mxu0 0.0
    %62 = vmatprep.subr.mxu0 0.0
    %63 = vmatpush1.msra.mxu0 0.0
    %64 = vmatprep.subr.mxu0 0.0
    %65 = vmatpush1.msra.mxu0 0.0
    %66 = vmatprep.subr.mxu0 0.0
    %67 = vmatpush1.msra.mxu0 0.0
    %68 = vmatprep.subr.mxu0 0.0
    %69 = vmatpush1.msra.mxu0 0.0
    %70 = vmatprep.subr.mxu0 0.0
    %71 = vmatpush1.msra.mxu0 0.0
    %72 = vmatprep.subr.mxu0 0.0
    %73 = vmatpush1.msra.mxu0 0.0
    %74 = vmatprep.subr.mxu0 0.0
    %75 = vmatpush1.msra.mxu0 0.0
    %76 = vmatprep.subr.mxu0 0.0
    %77 = vmatpush1.msra.mxu0 0.0
    %78 = vmatprep.subr.mxu0 0.0
    %79 = vmatpush1.msra.mxu0 0.0
    %80 = vmatprep.subr.mxu0 0.0
    %81 = vmatpush1.msra.mxu0 0.0
    %82 = vmatprep.subr.mxu0 0.0
    %83 = vmatpush1.msra.mxu0 0.0
    %84 = vmatprep.subr.mxu0 0.0
    %85 = vmatpush1.msra.mxu0 0.0
    %86 = vmatprep.subr.mxu0 0.0
    %87 = vmatpush1.msra.mxu0 0.0
    %88 = vmatprep.mubr.f32.mxu0 0.0
    %89 = vmatmul.mubr.f32.gmra.mrb[0].mxu0 %v22
    %v90 = vpop.f32.mrb[0].mxu0
    %v91 = vadd.f32 0.0, %v90
    %v92 = vpop.f32.mrb[0].mxu0
    %93 = vdwg.mxu0
    %vm94 = vcmask 80896
    %v95 = vsel %vm94, %v91, -inf
    %96 = vmax.xlane.f32.xlu0 %v95
    %v97 = vpop.xlane.xlu0 %96
    %v98 = vsub.f32 %v91, %v97
    %v99 = vmul.f32 %v98, 1.442695
    %v100 = vpow.pop %v99
    %v101 = vsel %vm94, %v100, 0.0
    %102 = vadd.xlane.f32.xlu0 %v101
    %v103 = vpop.xlane.xlu0 %102
    %v104 = vrcp.pop %v103
    %v105 = vmul.f32 %v100, %v104
    %s106 = smul.u32 0, 128
    %s107 = sshra.s32 %s106, 7
    %s108 = sand.u32 %s106, 127
    %s109 = scalar_lea.vmem %s2, %s107
    %v110 = vld [vmem:[%s109] sm:$0xff]
    %v111 = vld [vmem:[%s109 + $0x8] sm:$0x3]
    %v113 = vsel %vm94, %v105, 0
    %vm115 = vcmask 1041408
    %v117 = vsel %vm115, %v111, 0
    %119 = vmatprep.subr.mxu0 0.0
    %120 = vmatpush1.msra.mxu0 %v110
    %121 = vmatprep.subr.mxu0 0.0
    %122 = vmatpush1.msra.mxu0 %v117
    %123 = vmatprep.subr.mxu0 0.0
    %124 = vmatpush1.msra.mxu0 0.0
    %125 = vmatprep.subr.mxu0 0.0
    %126 = vmatpush1.msra.mxu0 0.0
    %127 = vmatprep.subr.mxu0 0.0
    %128 = vmatpush1.msra.mxu0 0.0
    %129 = vmatprep.subr.mxu0 0.0
    %130 = vmatpush1.msra.mxu0 0.0
    %131 = vmatprep.subr.mxu0 0.0
    %132 = vmatpush1.msra.mxu0 0.0
    %133 = vmatprep.subr.mxu0 0.0
    %134 = vmatpush1.msra.mxu0 0.0
    %135 = vmatprep.subr.mxu0 0.0
    %136 = vmatpush1.msra.mxu0 0.0
    %137 = vmatprep.subr.mxu0 0.0
    %138 = vmatpush1.msra.mxu0 0.0
    %139 = vmatprep.subr.mxu0 0.0
    %140 = vmatpush1.msra.mxu0 0.0
    %141 = vmatprep.subr.mxu0 0.0
    %142 = vmatpush1.msra.mxu0 0.0
    %143 = vmatprep.subr.mxu0 0.0
    %144 = vmatpush1.msra.mxu0 0.0
    %145 = vmatprep.subr.mxu0 0.0
    %146 = vmatpush1.msra.mxu0 0.0
    %147 = vmatprep.subr.mxu0 0.0
    %148 = vmatpush1.msra.mxu0 0.0
    %149 = vmatprep.subr.mxu0 0.0
    %150 = vmatpush1.msra.mxu0 0.0
    %151 = vmatprep.subr.mxu0 0.0
    %152 = vmatpush1.msra.mxu0 0.0
    %153 = vmatprep.subr.mxu0 0.0
    %154 = vmatpush1.msra.mxu0 0.0
    %155 = vmatprep.subr.mxu0 0.0
    %156 = vmatpush1.msra.mxu0 0.0
    %157 = vmatprep.subr.mxu0 0.0
    %158 = vmatpush1.msra.mxu0 0.0
    %159 = vmatprep.subr.mxu0 0.0
    %160 = vmatpush1.msra.mxu0 0.0
    %161 = vmatprep.subr.mxu0 0.0
    %162 = vmatpush1.msra.mxu0 0.0
    %163 = vmatprep.subr.mxu0 0.0
    %164 = vmatpush1.msra.mxu0 0.0
    %165 = vmatprep.subr.mxu0 0.0
    %166 = vmatpush1.msra.mxu0 0.0
    %167 = vmatprep.subr.mxu0 0.0
    %168 = vmatpush1.msra.mxu0 0.0
    %169 = vmatprep.subr.mxu0 0.0
    %170 = vmatpush1.msra.mxu0 0.0
    %171 = vmatprep.subr.mxu0 0.0
    %172 = vmatpush1.msra.mxu0 0.0
    %173 = vmatprep.subr.mxu0 0.0
    %174 = vmatpush1.msra.mxu0 0.0
    %175 = vmatprep.subr.mxu0 0.0
    %176 = vmatpush1.msra.mxu0 0.0
    %177 = vmatprep.subr.mxu0 0.0
    %178 = vmatpush1.msra.mxu0 0.0
    %179 = vmatprep.subr.mxu0 0.0
    %180 = vmatpush1.msra.mxu0 0.0
    %181 = vmatprep.subr.mxu0 0.0
    %182 = vmatpush1.msra.mxu0 0.0
    %183 = vmatprep.mubr.f32.mxu0 0.0
    %184 = vmatmul.mubr.f32.gmra.mrb[0].mxu0 %v113
    %v185 = vpop.f32.mrb[0].mxu0
    %v186 = vadd.f32 0.0, %v185
    %v187 = vpop.f32.mrb[0].mxu0
    %188 = vdwg.mxu0
    %189 = vst [vmem:[#allocation2] sm:$0xff] %v186
    // Predicated region
    $region14: #{tpu_custom_call.1} parent=1 // pred_check
      _
    $region15: #{tpu_custom_call.1} parent=1 // pred_check_branch
      %191 = sbr.rel (0) target = $region17
    $region16: #{tpu_custom_call.1} parent=1 // pred_region
      %s193 = ssub.s32 128, 128
      %194 = vsyncadd [#allocation3], %s193
      %s196 = sshll.u32 [#allocation2], 4
      %s197 = int_to_ptr.vmem [resolvable:$true] %s196
      %199 = dma.vmem_to_hbm [thread:$0]  %s197, 128, %s3, [#allocation3]
    $region17: #{tpu_custom_call.1} parent=1 // pred_fallthru
      _
    // Predicated region
    $region18: #{tpu_custom_call.1} parent=1 // pred_check
      _
    $region19: #{tpu_custom_call.1} parent=1 // pred_check_branch
      %201 = sbr.rel (0) target = $region21
    $region20: #{tpu_custom_call.1} parent=1 // pred_region
      %202 = dma.done [#allocation3], 128
    $region21: #{tpu_custom_call.1} parent=1 // pred_fallthru
      _
    %203 = vsyncpa [#allocation3], 1

</llo_original>
